<compile_context>
chip_gen: v7x
topology: tpu7x:2x2x1
jax: 0.10.0
libtpu: 0.0.40
codegen_flags: <defaults>
</compile_context>

<pallas_src>
import jax
import jax.numpy as jnp
from jax.experimental import pallas as pl
from jax.experimental.pallas import tpu as pltpu


def _round_up(x, m):
    return (x + m - 1) // m * m


def make_disc_kernel(n_groups, tb, seq_pad, n_pad, l_outs):
    """Build the per-(batch-tile, conv-group) kernel. All args are static."""

    def kernel(lhs_ref, wconv_ref, bconv_ref, hw_w_ref, hw_b_ref,
               f2o_w_ref, f2o_b_ref, out_ref, feat_ref):
        gi = pl.program_id(1)

        # ---- conv-group matmul: one lane-dense MXU dot, K = f_max*D --------
        y = jnp.dot(lhs_ref[...], wconv_ref[...],
                    preferred_element_type=jnp.float32)        # (TB*S_pad, n_pad)
        # S_pad % 8 == 0 -> sublane-aligned, layout-free reshape.
        y3 = y.reshape(tb, seq_pad, n_pad)

        # ---- mask invalid time windows (t >= seq_len - f_g + 1), max-pool ---
        l_out = jnp.int32(l_outs[0])
        for g in range(1, n_groups):
            l_out = jnp.where(gi == g, jnp.int32(l_outs[g]), l_out)
        t_idx = jax.lax.broadcasted_iota(jnp.int32, (1, seq_pad, 1), 1)
        y3 = jnp.where(t_idx < l_out, y3, jnp.float32(-1e30))
        feat_ref[gi] = jnp.max(y3, axis=1)                      # (TB, n_pad)

        # ---- finalize on the last conv group --------------------------------
        @pl.when(gi == n_groups - 1)
        def _():
            # 128-aligned static slots -> cheap lane-aligned concat.
            feature = jnp.concatenate(
                [feat_ref[g] for g in range(n_groups)], axis=1)  # (TB, F_pad)
            # bias + ReLU commute with the time max (monotonicity); padded
            # lanes stay exactly 0 through highway and feature2out.
            feature = jnp.maximum(feature + bconv_ref[...], 0.0)

            hw = jnp.dot(feature.astype(hw_w_ref.dtype), hw_w_ref[...],
                         preferred_element_type=jnp.float32) + hw_b_ref[...]
            # sigmoid on the EUP slot: exp + approximate reciprocal.
            sig = pl.reciprocal(1.0 + jnp.exp(-hw), approx=True)
            new_feat = sig * jnp.maximum(hw, 0.0) + (1.0 - sig) * feature

            # TODO(synk): nn.Dropout is train-mode only; identity at inference.
            out = jnp.dot(new_feat.astype(f2o_w_ref.dtype), f2o_w_ref[...],
                          preferred_element_type=jnp.float32) + f2o_b_ref[...]
            out_ref[...] = out.astype(out_ref.dtype)             # (TB, 128)

    return kernel


def cnn_discriminator_forward(inp, params, filter_sizes, num_filters):
    emb_table = params["embedding"]                              # (V, D) f32
    B, S = inp.shape
    D = emb_table.shape[1]
    fs = tuple(filter_sizes)
    nf = tuple(num_filters)
    n_groups = len(fs)
    f_max = max(fs)
    assert S >= f_max, "seq_len must be >= max(filter_sizes)"

    OUT_PAD = 128
    NPAD = _round_up(max(nf), 128)       # per-group 128-aligned feature slot
    F_pad = n_groups * NPAD
    K = f_max * D
    K_pad = _round_up(K, 128)

    # Batch tile: >= 2 grid steps on the "parallel" axis whenever B > 8 so the
    # second TensorCore (v7x) gets work; cap at 128 to bound VMEM.
    # TODO(synk): sweep TB up to 256-512 on v5e/v6e for large B (128 MiB VMEM).
    TB = max(8, min(128, _round_up((B + 1) // 2, 8)))
    B_pad = _round_up(B, TB)
    S_pad = _round_up(S, 8)

    # ---- im2col LHS: fold all taps into K (lane-concat of shifted copies) ---
    # Embedding lookup stays in JAX glue, gathered directly in bf16.
    # TODO(synk): for large B*S*D move the gather in-kernel (token ids as
    #   scalar prefetch + per-row DMA) to avoid the HBM round-trip.
    # TODO(synk): for very large f_max, cap the fold factor (e.g. 4 taps) and
    #   keep a short tap-add loop to bound the f_max-times LHS expansion.
    emb = jnp.take(emb_table, inp, axis=0).astype(jnp.bfloat16)  # (B, S, D)
    emb = jnp.pad(emb, ((0, B_pad - B), (0, S_pad + f_max - 1 - S), (0, 0)))
    lhs = jnp.concatenate([emb[:, k:k + S_pad, :] for k in range(f_max)],
                          axis=-1)                               # (B_pad, S_pad, f_max*D)
    if K_pad > K:
        lhs = jnp.pad(lhs, ((0, 0), (0, 0), (0, K_pad - K)))
    lhs = lhs.reshape(B_pad * S_pad, K_pad)

    # ---- stacked conv weight: one lane-aligned (K_pad, NPAD) slab per group -
    w_slabs, b_slabs = [], []
    for i, (f, n) in enumerate(zip(fs, nf)):
        w = params[f"conv{i}_w"]                                 # (f, D, n)
        w = jnp.pad(w, ((0, 0), (0, 0), (0, NPAD - n))).reshape(f * D, NPAD)
        w_slabs.append(jnp.pad(w, ((0, K_pad - f * D), (0, 0))))
        b_slabs.append(jnp.pad(params[f"conv{i}_b"], ((0, 0), (0, NPAD - n))))
    w_stack = jnp.concatenate(w_slabs, axis=1).astype(jnp.bfloat16)  # (K_pad, F_pad)
    b_stack = jnp.concatenate(b_slabs, axis=1).astype(jnp.float32)   # (1, F_pad)

    # ---- highway / feature2out, scattered into the 128-aligned layout -------
    perm = jnp.concatenate(
        [g * NPAD + jnp.arange(n) for g, n in enumerate(nf)])    # (F_dim,)
    hw_w = jnp.zeros((F_pad, F_pad), jnp.float32
                     ).at[perm[:, None], perm[None, :]].set(params["highway_w"])
    hw_b = jnp.zeros((1, F_pad), jnp.float32).at[:, perm].set(params["highway_b"])
    f2o_w = jnp.zeros((F_pad, OUT_PAD), jnp.float32
                      ).at[perm, :2].set(params["f2o_w"])
    f2o_b = jnp.pad(params["f2o_b"], ((0, 0), (0, OUT_PAD - 2))).astype(jnp.float32)
    hw_w = hw_w.astype(jnp.bfloat16)
    f2o_w = f2o_w.astype(jnp.bfloat16)

    # ---- explicit VMEM budget ------------------------------------------------
    vmem_est = (
        2 * TB * S_pad * K_pad * 2          # lhs block (bf16, double-buffered)
        + 2 * K_pad * NPAD * 2              # conv weight slab (bf16, double-buffered)
        + 2 * F_pad * 4 * 2                 # conv bias + highway bias
        + 2 * F_pad * F_pad * 2             # highway weight (bf16, resident)
        + 2 * F_pad * OUT_PAD * 2           # feature2out weight (bf16)
        + 2 * OUT_PAD * 4                   # feature2out bias
        + 2 * TB * OUT_PAD * 4              # output block (f32)
        + n_groups * TB * NPAD * 4          # feature scratch (f32)
        + TB * S_pad * NPAD * 4             # conv matmul output (f32)
        + 6 * TB * F_pad * 4                # finalize temporaries (f32)
    )
    vmem_limit = int(min(100 * 2**20, max(16 * 2**20, 2 * vmem_est)))

    kernel = make_disc_kernel(n_groups, TB, S_pad, NPAD,
                              tuple(S - f + 1 for f in fs))

    out = pl.pallas_call(
        kernel,
        out_shape=jax.ShapeDtypeStruct((B_pad, OUT_PAD), jnp.float32),
        grid_spec=pltpu.PrefetchScalarGridSpec(
            num_scalar_prefetch=0,
            grid=(B_pad // TB, n_groups),
            in_specs=[
                pl.BlockSpec((TB * S_pad, K_pad), lambda bi, gi: (bi, 0)),   # im2col lhs
                pl.BlockSpec((K_pad, NPAD), lambda bi, gi: (0, gi)),         # conv w slab
                pl.BlockSpec((1, F_pad), lambda bi, gi: (0, 0)),             # conv bias
                pl.BlockSpec((F_pad, F_pad), lambda bi, gi: (0, 0)),         # highway w
                pl.BlockSpec((1, F_pad), lambda bi, gi: (0, 0)),             # highway b
                pl.BlockSpec((F_pad, OUT_PAD), lambda bi, gi: (0, 0)),       # f2o w
                pl.BlockSpec((1, OUT_PAD), lambda bi, gi: (0, 0)),           # f2o b
            ],
            out_specs=pl.BlockSpec((TB, OUT_PAD), lambda bi, gi: (bi, 0)),
            scratch_shapes=[pltpu.VMEM((n_groups, TB, NPAD), jnp.float32)],
        ),
        compiler_params=pltpu.CompilerParams(
            dimension_semantics=("parallel", "arbitrary"),
            vmem_limit_bytes=vmem_limit),
    )(lhs, w_stack, b_stack, hw_w, hw_b, f2o_w, f2o_b)

    return out[:B, :2]


def init_params(key, vocab_size, embed_dim, filter_sizes, num_filters, std=0.1):
    """Deterministic synthetic init, normal(std=0.1) like init_params() in torch."""
    F_dim = sum(num_filters)
    n_keys = 1 + 2 * len(filter_sizes) + 4
    keys = iter(jax.random.split(key, n_keys))
    params = {}
    params["embedding"] = std * jax.random.normal(
        next(keys), (vocab_size, embed_dim), jnp.float32)
    for i, (f, n) in enumerate(zip(filter_sizes, num_filters)):
        # PyTorch conv weight is (n, 1, f, D); stored here pre-laid-out as (f, D, n).
        params[f"conv{i}_w"] = std * jax.random.normal(
            next(keys), (f, embed_dim, n), jnp.float32)
        params[f"conv{i}_b"] = std * jax.random.normal(
            next(keys), (1, n), jnp.float32)
    # PyTorch Linear weights are (out, in); stored here pre-transposed to (in, out).
    params["highway_w"] = std * jax.random.normal(
        next(keys), (F_dim, F_dim), jnp.float32)
    params["highway_b"] = std * jax.random.normal(
        next(keys), (1, F_dim), jnp.float32)
    params["f2o_w"] = std * jax.random.normal(next(keys), (F_dim, 2), jnp.float32)
    params["f2o_b"] = std * jax.random.normal(next(keys), (1, 2), jnp.float32)
    return params


def reference_forward(inp, params, filter_sizes, num_filters):
    """Pure-JAX reference of the PyTorch forward (eval mode), with matmul
    inputs cast to bf16 / f32 accumulation to mirror the kernel's MXU path."""
    emb = jnp.take(params["embedding"], inp, axis=0).astype(jnp.bfloat16)
    S = emb.shape[1]
    pools = []
    for i, (f, n) in enumerate(zip(filter_sizes, num_filters)):
        w = params[f"conv{i}_w"].astype(jnp.bfloat16)            # (f, D, n)
        b = params[f"conv{i}_b"]                                 # (1, n)
        l_out = S - f + 1
        acc = jnp.zeros((emb.shape[0], l_out, n), jnp.float32)
        for k in range(f):
            acc = acc + jnp.einsum("bld,dn->bln", emb[:, k:k + l_out, :], w[k],
                                   preferred_element_type=jnp.float32)
        acc = jax.nn.relu(acc + b)
        pools.append(jnp.max(acc, axis=1))
    feature = jnp.concatenate(pools, axis=1)
    hw = jnp.dot(feature.astype(jnp.bfloat16),
                 params["highway_w"].astype(jnp.bfloat16),
                 preferred_element_type=jnp.float32) + params["highway_b"]
    sig = 1.0 / (1.0 + jnp.exp(-hw))
    feat2 = sig * jax.nn.relu(hw) + (1.0 - sig) * feature
    return jnp.dot(feat2.astype(jnp.bfloat16),
                   params["f2o_w"].astype(jnp.bfloat16),
                   preferred_element_type=jnp.float32) + params["f2o_b"]


if __name__ == "__main__":
    vocab_size = 20
    embed_dim = 32
    seq_len = 8
    batch = 2
    filter_sizes = (2, 3)
    num_filters = (4, 6)
    padding_idx = 0  # note: torch init_params overwrites the padding row anyway

    key = jax.random.PRNGKey(0)
    pkey, ikey = jax.random.split(key)
    params = init_params(pkey, vocab_size, embed_dim, filter_sizes, num_filters)
    inp = jax.random.randint(ikey, (batch, seq_len), 0, vocab_size,
                             dtype=jnp.int32)

    out = cnn_discriminator_forward(inp, params, filter_sizes, num_filters)
    out = jax.block_until_ready(out)

    ref = reference_forward(inp, params, filter_sizes, num_filters)
    assert out.shape == (batch, 2), out.shape
    assert jnp.allclose(out, ref, atol=2e-3, rtol=2e-2), (out, ref)
    print("KERNEL_OK")
</pallas_src>

<mosaic_0001>
module attributes {stable_mosaic.version = 11 : i64} {
  func.func @kernel(%arg0: i32, %arg1: i32, %arg2: memref<64x128xbf16, #tpu.memory_space<vmem>>, %arg3: memref<128x128xbf16, #tpu.memory_space<vmem>>, %arg4: memref<1x256xf32, #tpu.memory_space<vmem>>, %arg5: memref<256x256xbf16, #tpu.memory_space<vmem>>, %arg6: memref<1x256xf32, #tpu.memory_space<vmem>>, %arg7: memref<256x128xbf16, #tpu.memory_space<vmem>>, %arg8: memref<1x128xf32, #tpu.memory_space<vmem>>, %arg9: memref<8x128xf32, #tpu.memory_space<vmem>>, %arg10: memref<2x8x128xf32, #tpu.memory_space<vmem>>) attributes {dimension_semantics = [#tpu.dimension_semantics<parallel>, #tpu.dimension_semantics<arbitrary>], iteration_bounds = array<i64: 1, 2>, scalar_prefetch = 0 : i64, scratch_operands = 1 : i64, tpu.core_type = #tpu.core_type<tc>, window_params = [{transform_indices = @transform_0, window_bounds = array<i64: 64, 128>}, {transform_indices = @transform_1, window_bounds = array<i64: 128, 128>}, {pipeline_mode = #tpu.pipeline_mode<synchronous>, transform_indices = @transform_2, window_bounds = array<i64: 1, 256>}, {pipeline_mode = #tpu.pipeline_mode<synchronous>, transform_indices = @transform_3, window_bounds = array<i64: 256, 256>}, {pipeline_mode = #tpu.pipeline_mode<synchronous>, transform_indices = @transform_4, window_bounds = array<i64: 1, 256>}, {pipeline_mode = #tpu.pipeline_mode<synchronous>, transform_indices = @transform_5, window_bounds = array<i64: 256, 128>}, {pipeline_mode = #tpu.pipeline_mode<synchronous>, transform_indices = @transform_6, window_bounds = array<i64: 1, 128>}, {transform_indices = @transform_7, window_bounds = array<i64: 8, 128>}]} {
    %c0 = arith.constant 0 : index
    %c0_0 = arith.constant 0 : index
    %0 = vector.load %arg2[%c0, %c0_0] : memref<64x128xbf16, #tpu.memory_space<vmem>>, vector<64x128xbf16>
    %c0_1 = arith.constant 0 : index
    %c0_2 = arith.constant 0 : index
    %1 = vector.load %arg3[%c0_1, %c0_2] : memref<128x128xbf16, #tpu.memory_space<vmem>>, vector<128x128xbf16>
    %cst = arith.constant dense<0.000000e+00> : vector<64x128xf32>
    %2 = tpu.matmul %0, %1, %cst {dimension_numbers = #tpu.dot_dimension_numbers<[1], [0], [0], [1], [0, 0, 1, 1], [], []>} : vector<64x128xbf16>, vector<128x128xbf16>, vector<64x128xf32> -> vector<64x128xf32>
    %3 = vector.shape_cast %2 : vector<64x128xf32> to vector<8x8x128xf32>
    %c1_i32 = arith.constant 1 : i32
    %4 = arith.cmpi eq, %arg1, %c1_i32 : i32
    %c6_i32 = arith.constant 6 : i32
    %c7_i32 = arith.constant 7 : i32
    %5 = arith.select %4, %c6_i32, %c7_i32 : i32
    %6 = tpu.iota {dimensions = array<i32: 1>} : vector<1x8x1xi32>
    %7 = vector.broadcast %5 : i32 to vector<1x8x1xi32>
    %8 = arith.cmpi slt, %6, %7 : vector<1x8x1xi32>
    %cst_3 = arith.constant -1.000000e+30 : f32
    %9 = vector.shape_cast %8 : vector<1x8x1xi1> to vector<1x8x1xi1>
    %10 = vector.broadcast %9 : vector<1x8x1xi1> to vector<8x8x128xi1>
    %11 = vector.broadcast %cst_3 : f32 to vector<8x8x128xf32>
    %12 = arith.select %10, %3, %11 : vector<8x8x128xi1>, vector<8x8x128xf32>
    %cst_4 = arith.constant dense<0xFF800000> : vector<8x128xf32>
    %13 = vector.multi_reduction <maximumf>, %12, %cst_4 [1] : vector<8x8x128xf32> to vector<8x128xf32>
    %14 = arith.index_cast %arg1 : i32 to index
    %c0_5 = arith.constant 0 : index
    %c0_6 = arith.constant 0 : index
    %15 = vector.load %arg10[%14, %c0_5, %c0_6] : memref<2x8x128xf32, #tpu.memory_space<vmem>>, vector<1x8x128xf32>
    %16 = vector.shape_cast %15 : vector<1x8x128xf32> to vector<8x128xf32>
    %17 = vector.shape_cast %13 : vector<8x128xf32> to vector<1x8x128xf32>
    tpu.vector_store %arg10[%14, %c0_5, %c0_6], %17 {strides = array<i32>} : memref<2x8x128xf32, #tpu.memory_space<vmem>>, vector<1x8x128xf32>,
    %c1_i32_7 = arith.constant 1 : i32
    %18 = arith.cmpi eq, %arg1, %c1_i32_7 : i32
    %19 = arith.extui %18 : i1 to i32
    %c0_i32 = arith.constant 0 : i32
    %20 = arith.cmpi ne, %19, %c0_i32 : i32
    scf.if %20 {
      %c0_8 = arith.constant 0 : index
      %c0_9 = arith.constant 0 : index
      %c0_10 = arith.constant 0 : index
      %21 = vector.load %arg10[%c0_8, %c0_9, %c0_10] : memref<2x8x128xf32, #tpu.memory_space<vmem>>, vector<1x8x128xf32>
      %22 = vector.shape_cast %21 : vector<1x8x128xf32> to vector<8x128xf32>
      %c1 = arith.constant 1 : index
      %c0_11 = arith.constant 0 : index
      %c0_12 = arith.constant 0 : index
      %23 = vector.load %arg10[%c1, %c0_11, %c0_12] : memref<2x8x128xf32, #tpu.memory_space<vmem>>, vector<1x8x128xf32>
      %24 = vector.shape_cast %23 : vector<1x8x128xf32> to vector<8x128xf32>
      %25 = tpu.concatenate %22, %24 in 1 : vector<8x128xf32>, vector<8x128xf32> -> vector<8x256xf32>
      %c0_13 = arith.constant 0 : index
      %c0_14 = arith.constant 0 : index
      %26 = vector.load %arg4[%c0_13, %c0_14] : memref<1x256xf32, #tpu.memory_space<vmem>>, vector<1x256xf32>
      %27 = vector.broadcast %26 : vector<1x256xf32> to vector<8x256xf32>
      %28 = arith.addf %25, %27 : vector<8x256xf32>
      %cst_15 = arith.constant 0.000000e+00 : f32
      %29 = vector.broadcast %cst_15 : f32 to vector<8x256xf32>
      %30 = arith.maximumf %28, %29 : vector<8x256xf32>
      %31 = arith.truncf %30 : vector<8x256xf32> to vector<8x256xbf16>
      %c0_16 = arith.constant 0 : index
      %c0_17 = arith.constant 0 : index
      %32 = vector.load %arg5[%c0_16, %c0_17] : memref<256x256xbf16, #tpu.memory_space<vmem>>, vector<256x256xbf16>
      %cst_18 = arith.constant dense<0.000000e+00> : vector<8x256xf32>
      %33 = tpu.matmul %31, %32, %cst_18 {dimension_numbers = #tpu.dot_dimension_numbers<[1], [0], [0], [1], [0, 0, 1, 1], [], []>} : vector<8x256xbf16>, vector<256x256xbf16>, vector<8x256xf32> -> vector<8x256xf32>
      %c0_19 = arith.constant 0 : index
      %c0_20 = arith.constant 0 : index
      %34 = vector.load %arg6[%c0_19, %c0_20] : memref<1x256xf32, #tpu.memory_space<vmem>>, vector<1x256xf32>
      %35 = vector.broadcast %34 : vector<1x256xf32> to vector<8x256xf32>
      %36 = arith.addf %33, %35 : vector<8x256xf32>
      %cst_21 = arith.constant 0.000000e+00 : f32
      %37 = vector.broadcast %cst_21 : f32 to vector<8x256xf32>
      %38 = arith.subf %37, %36 : vector<8x256xf32>
      %39 = math.exp %38 : vector<8x256xf32>
      %cst_22 = arith.constant 1.000000e+00 : f32
      %40 = vector.broadcast %cst_22 : f32 to vector<8x256xf32>
      %41 = arith.addf %40, %39 : vector<8x256xf32>
      %42 = tpu.reciprocal %41 {approx = true} : vector<8x256xf32> -> vector<8x256xf32>
      %cst_23 = arith.constant 0.000000e+00 : f32
      %43 = vector.broadcast %cst_23 : f32 to vector<8x256xf32>
      %44 = arith.maximumf %36, %43 : vector<8x256xf32>
      %45 = arith.mulf %42, %44 : vector<8x256xf32>
      %cst_24 = arith.constant 1.000000e+00 : f32
      %46 = vector.broadcast %cst_24 : f32 to vector<8x256xf32>
      %47 = arith.subf %46, %42 : vector<8x256xf32>
      %48 = arith.mulf %47, %30 : vector<8x256xf32>
      %49 = arith.addf %45, %48 : vector<8x256xf32>
      %50 = arith.truncf %49 : vector<8x256xf32> to vector<8x256xbf16>
      %c0_25 = arith.constant 0 : index
      %c0_26 = arith.constant 0 : index
      %51 = vector.load %arg7[%c0_25, %c0_26] : memref<256x128xbf16, #tpu.memory_space<vmem>>, vector<256x128xbf16>
      %cst_27 = arith.constant dense<0.000000e+00> : vector<8x128xf32>
      %52 = tpu.matmul %50, %51, %cst_27 {dimension_numbers = #tpu.dot_dimension_numbers<[1], [0], [0], [1], [0, 0, 1, 1], [], []>} : vector<8x256xbf16>, vector<256x128xbf16>, vector<8x128xf32> -> vector<8x128xf32>
      %c0_28 = arith.constant 0 : index
      %c0_29 = arith.constant 0 : index
      %53 = vector.load %arg8[%c0_28, %c0_29] : memref<1x128xf32, #tpu.memory_space<vmem>>, vector<1x128xf32>
      %54 = vector.broadcast %53 : vector<1x128xf32> to vector<8x128xf32>
      %55 = arith.addf %52, %54 : vector<8x128xf32>
      %c0_30 = arith.constant 0 : index
      %c0_31 = arith.constant 0 : index
      %56 = vector.load %arg9[%c0_30, %c0_31] : memref<8x128xf32, #tpu.memory_space<vmem>>, vector<8x128xf32>
      tpu.vector_store %arg9[%c0_30, %c0_31], %55 {strides = array<i32>} : memref<8x128xf32, #tpu.memory_space<vmem>>, vector<8x128xf32>,
    } else {
    }
    return
  }
  func.func @transform_0(%arg0: i32, %arg1: i32) -> (i32, i32) {
    %c0_i32 = arith.constant 0 : i32
    %c0_i32_0 = arith.constant 0 : i32
    return %arg0, %c0_i32 : i32, i32
  }
  func.func @transform_1(%arg0: i32, %arg1: i32) -> (i32, i32) {
    %c0_i32 = arith.constant 0 : i32
    %c0_i32_0 = arith.constant 0 : i32
    return %c0_i32, %arg1 : i32, i32
  }
  func.func @transform_2(%arg0: i32, %arg1: i32) -> (i32, i32) {
    %c0_i32 = arith.constant 0 : i32
    %c0_i32_0 = arith.constant 0 : i32
    %c0_i32_1 = arith.constant 0 : i32
    return %c0_i32, %c0_i32_0 : i32, i32
  }
  func.func @transform_3(%arg0: i32, %arg1: i32) -> (i32, i32) {
    %c0_i32 = arith.constant 0 : i32
    %c0_i32_0 = arith.constant 0 : i32
    %c0_i32_1 = arith.constant 0 : i32
    return %c0_i32, %c0_i32_0 : i32, i32
  }
  func.func @transform_4(%arg0: i32, %arg1: i32) -> (i32, i32) {
    %c0_i32 = arith.constant 0 : i32
    %c0_i32_0 = arith.constant 0 : i32
    %c0_i32_1 = arith.constant 0 : i32
    return %c0_i32, %c0_i32_0 : i32, i32
  }
  func.func @transform_5(%arg0: i32, %arg1: i32) -> (i32, i32) {
    %c0_i32 = arith.constant 0 : i32
    %c0_i32_0 = arith.constant 0 : i32
    %c0_i32_1 = arith.constant 0 : i32
    return %c0_i32, %c0_i32_0 : i32, i32
  }
  func.func @transform_6(%arg0: i32, %arg1: i32) -> (i32, i32) {
    %c0_i32 = arith.constant 0 : i32
    %c0_i32_0 = arith.constant 0 : i32
    %c0_i32_1 = arith.constant 0 : i32
    return %c0_i32, %c0_i32_0 : i32, i32
  }
  func.func @transform_7(%arg0: i32, %arg1: i32) -> (i32, i32) {
    %c0_i32 = arith.constant 0 : i32
    %c0_i32_0 = arith.constant 0 : i32
    return %arg0, %c0_i32 : i32, i32
  }
}

</mosaic_0001>

<llo_original>
// kernel: tpu_custom_call.1
$region0: #{tpu_custom_call.1}
  #allocation0 [shape = 'u32[]', space=smem, size = 0x4, offset = 0x4, fixed_abs, tag = 'smem constant byte address 0x4 - core index']
  #allocation1 [shape = 'u32[144,128]{1,0:T(1,128)}', space=vmem, size = 0x12000, scoped, tag = 'internal scratch']
  #allocation2 [shape = 'f32[2,8,128]{2,1,0:T(8,128)}', space=vmem, size = 0x2000, scoped, tag = 'scratch operand']
  %s0 = inlined_call_operand.hbm [shape: bf16[64,128], index: 0, kind: input, shape index: {}]
  %s1 = inlined_call_operand.hbm [shape: bf16[128,256], index: 1, kind: input, shape index: {}]
  %s2 = inlined_call_operand.vmem [shape: f32[1,256], index: 2, kind: input, shape index: {}]
  %s3 = inlined_call_operand.hbm [shape: bf16[256,256], index: 3, kind: input, shape index: {}]
  %s4 = inlined_call_operand.vmem [shape: f32[1,256], index: 4, kind: input, shape index: {}]
  %s5 = inlined_call_operand.hbm [shape: bf16[256,128], index: 5, kind: input, shape index: {}]
  %s6 = inlined_call_operand.vmem [shape: f32[1,128], index: 6, kind: input, shape index: {}]
  %s7 = inlined_call_operand.hbm [shape: f32[8,128], index: 7, kind: output, shape index: {}]
  %s8 = sld [smem:[#allocation0]]
  $region81: #{tpu_custom_call.1} parent=0
    _
  %s10 = ssub.s32 1, %s8
  %s11 = scalar_select 0, %s10, %s8
  $region1: #{tpu_custom_call.1} parent=0
    #allocation3 [shape = 'u8[16384]{0}', space=vmem, size = 0x4000, scoped, tag = 'input window, operand 0, single buffered']
    #allocation4 [shape = 's32[2]{0}', space=sflag, size = 0x8, scoped, tag = 'scoped memory for tpu_custom_call.1']
    #allocation5 [shape = 's32[2]{0}', space=sflag, size = 0x8, scoped, tag = 'scoped memory for tpu_custom_call.1']
    #allocation6 [shape = 'u8[65536]{0}', space=vmem, size = 0x10000, scoped, tag = 'input window, operand 1']
    #allocation7 [shape = 's32[2]{0}', space=sflag, size = 0x8, scoped, tag = 'scoped memory for tpu_custom_call.1']
    #allocation8 [shape = 'u8[131072]{0}', space=vmem, size = 0x20000, scoped, tag = 'input window, operand 3, single buffered']
    #allocation9 [shape = 'u8[65536]{0}', space=vmem, size = 0x10000, scoped, tag = 'input window, operand 5, single buffered']
    #allocation10 [shape = 's32[1]{0}', space=sflag, size = 0x4, scoped, tag = 'scoped memory for tpu_custom_call.1']
    #allocation11 [shape = 'u8[4096]{0}', space=vmem, size = 0x1000, scoped, tag = 'output window, operand 0, single buffered']
    %12 = vsyncpa [#allocation4], 0
    %13 = vsyncpa [#allocation7], 0
    %s14 = scalar_lea.sflag [#allocation7], 1
    %15 = vsyncpa %s14, 0
    %16 = vsyncpa [#allocation10], 0
    %17 = vsyncpa [#allocation5], 0
    loop: start=0, step=1, limit=4
    $region2: #{tpu_custom_call.1} parent=1 // loop_pre_header
      _
    $region3: #{tpu_custom_call.1} parent=1 // loop_header
      %s19 = sphi 0, %s23
      %p20 = scmp.ge.s32.totalorder %s19, 4
      %s26 = sphi 0, %s38
      %s27 = sphi 0, %s34
      %s28 = sphi 0, %s26
      %s29 = sphi 0, %s27
      %s30 = sphi 0, %s28
      %s31 = sphi 0, %s29
      %s41 = sphi 0, %s43
      %s44 = sphi 0, %s41
      %s45 = sphi 0, %s44
      %s61 = sphi 0, %s45
      %s67 = sphi 0, %s69
      %s70 = sphi 0, %s67
      %s71 = sphi 0, %s70
      %s87 = sphi 0, %s71
      %s91 = sphi 0, %s91
      %s93 = sphi 0, %s91
      %s94 = sphi 0, %s93
      %s108 = sphi 0, %s94
      %s112 = sphi 0, %s112
      %s114 = sphi 0, %s112
      %s115 = sphi 0, %s114
      %s129 = sphi 0, %s115
      %s133 = sphi 0, %s133
      %s135 = sphi 0, %s133
      %s136 = sphi 0, %s135
      %s150 = sphi 0, %s136
      %s154 = sphi 0, %s154
      %s156 = sphi 0, %s154
      %s157 = sphi 0, %s156
      %s171 = sphi 0, %s157
      %s175 = sphi 0, %s175
      %s177 = sphi 0, %s175
      %s178 = sphi 0, %s177
      %s192 = sphi 0, %s178
      %s198 = sphi 0, %s200
      %s201 = sphi 0, %s198
      %s202 = sphi 0, %s201
      %s218 = sphi 0, %s202
    $region4: #{tpu_custom_call.1} parent=1 // loop_header_branch
      %22 = sbr.rel (%p20) target = $region8
    $region5: #{tpu_custom_call.1} parent=1 // loop_body
      %s24 = ssub.s32 %s19, 1
      %s25 = ssub.s32 %s19, 2
      %s32 = sadd.s32 1, %s27
      %p33 = scmp.ge.s32.totalorder %s32, 2
      %s34 = scalar_select %p33, 0, %s32
      %s35 = sadd.s32 1, %s26
      %s36 = scalar_select %p33, %s35, %s26
      %p37 = scmp.ge.s32.totalorder %s36, 1
      %s38 = scalar_select %p37, 0, %s36
      %s39 = ssub.s32 %s26, %s38
      %p40 = scmp.eq.s32.totalorder %s39, 0
      %s42 = sadd.s32 %s41, 1
      %s43 = scalar_select %p40, %s41, %s42
      %p46 = pneg %p40
      %p47 = scmp.eq.s32.totalorder %s19, 1
      %p48 = por %p46, %p47
      %p49 = scmp.ne.s32.totalorder %s41, %s44
      %p50 = scmp.eq.s32.totalorder %s19, 0
      %p51 = por %p49, %p50
      %p52 = scmp.ne.s32.totalorder %s41, %s44
      %p53 = scmp.eq.s32.totalorder %s24, 1
      %p54 = por %p52, %p53
      %p55 = scmp.ne.s32.totalorder %s44, %s45
      %p56 = scmp.eq.s32.totalorder %s24, 0
      %p57 = por %p55, %p56
      %p58 = scmp.ne.s32.totalorder %s44, %s45
      %p59 = scmp.eq.s32.totalorder %s25, 1
      %p60 = por %p58, %p59
      %p62 = scmp.ne.s32.totalorder %s45, %s61
      %p63 = scmp.eq.s32.totalorder %s25, 0
      %p64 = por %p62, %p63
      %s65 = ssub.s32 %s27, %s34
      %p66 = scmp.eq.s32.totalorder %s65, 0
      %s68 = sadd.s32 %s67, 1
      %s69 = scalar_select %p66, %s67, %s68
      %p72 = pneg %p66
      %p73 = scmp.eq.s32.totalorder %s19, 1
      %p74 = por %p72, %p73
      %p75 = scmp.ne.s32.totalorder %s67, %s70
      %p76 = scmp.eq.s32.totalorder %s19, 0
      %p77 = por %p75, %p76
      %p78 = scmp.ne.s32.totalorder %s67, %s70
      %p79 = scmp.eq.s32.totalorder %s24, 1
      %p80 = por %p78, %p79
      %p81 = scmp.ne.s32.totalorder %s70, %s71
      %p82 = scmp.eq.s32.totalorder %s24, 0
      %p83 = por %p81, %p82
      %p84 = scmp.ne.s32.totalorder %s70, %s71
      %p85 = scmp.eq.s32.totalorder %s25, 1
      %p86 = por %p84, %p85
      %p88 = scmp.ne.s32.totalorder %s71, %s87
      %p89 = scmp.eq.s32.totalorder %s25, 0
      %p90 = por %p88, %p89
      %s92 = sadd.s32 %s91, 1
      %p95 = scmp.eq.s32.totalorder %s19, 1
      %p96 = scmp.ne.s32.totalorder %s91, %s93
      %p97 = scmp.eq.s32.totalorder %s19, 0
      %p98 = por %p96, %p97
      %p99 = scmp.ne.s32.totalorder %s91, %s93
      %p100 = scmp.eq.s32.totalorder %s24, 1
      %p101 = por %p99, %p100
      %p102 = scmp.ne.s32.totalorder %s93, %s94
      %p103 = scmp.eq.s32.totalorder %s24, 0
      %p104 = por %p102, %p103
      %p105 = scmp.ne.s32.totalorder %s93, %s94
      %p106 = scmp.eq.s32.totalorder %s25, 1
      %p107 = por %p105, %p106
      %p109 = scmp.ne.s32.totalorder %s94, %s108
      %p110 = scmp.eq.s32.totalorder %s25, 0
      %p111 = por %p109, %p110
      %s113 = sadd.s32 %s112, 1
      %p116 = scmp.eq.s32.totalorder %s19, 1
      %p117 = scmp.ne.s32.totalorder %s112, %s114
      %p118 = scmp.eq.s32.totalorder %s19, 0
      %p119 = por %p117, %p118
      %p120 = scmp.ne.s32.totalorder %s112, %s114
      %p121 = scmp.eq.s32.totalorder %s24, 1
      %p122 = por %p120, %p121
      %p123 = scmp.ne.s32.totalorder %s114, %s115
      %p124 = scmp.eq.s32.totalorder %s24, 0
      %p125 = por %p123, %p124
      %p126 = scmp.ne.s32.totalorder %s114, %s115
      %p127 = scmp.eq.s32.totalorder %s25, 1
      %p128 = por %p126, %p127
      %p130 = scmp.ne.s32.totalorder %s115, %s129
      %p131 = scmp.eq.s32.totalorder %s25, 0
      %p132 = por %p130, %p131
      %s134 = sadd.s32 %s133, 1
      %p137 = scmp.eq.s32.totalorder %s19, 1
      %p138 = scmp.ne.s32.totalorder %s133, %s135
      %p139 = scmp.eq.s32.totalorder %s19, 0
      %p140 = por %p138, %p139
      %p141 = scmp.ne.s32.totalorder %s133, %s135
      %p142 = scmp.eq.s32.totalorder %s24, 1
      %p143 = por %p141, %p142
      %p144 = scmp.ne.s32.totalorder %s135, %s136
      %p145 = scmp.eq.s32.totalorder %s24, 0
      %p146 = por %p144, %p145
      %p147 = scmp.ne.s32.totalorder %s135, %s136
      %p148 = scmp.eq.s32.totalorder %s25, 1
      %p149 = por %p147, %p148
      %p151 = scmp.ne.s32.totalorder %s136, %s150
      %p152 = scmp.eq.s32.totalorder %s25, 0
      %p153 = por %p151, %p152
      %s155 = sadd.s32 %s154, 1
      %p158 = scmp.eq.s32.totalorder %s19, 1
      %p159 = scmp.ne.s32.totalorder %s154, %s156
      %p160 = scmp.eq.s32.totalorder %s19, 0
      %p161 = por %p159, %p160
      %p162 = scmp.ne.s32.totalorder %s154, %s156
      %p163 = scmp.eq.s32.totalorder %s24, 1
      %p164 = por %p162, %p163
      %p165 = scmp.ne.s32.totalorder %s156, %s157
      %p166 = scmp.eq.s32.totalorder %s24, 0
      %p167 = por %p165, %p166
      %p168 = scmp.ne.s32.totalorder %s156, %s157
      %p169 = scmp.eq.s32.totalorder %s25, 1
      %p170 = por %p168, %p169
      %p172 = scmp.ne.s32.totalorder %s157, %s171
      %p173 = scmp.eq.s32.totalorder %s25, 0
      %p174 = por %p172, %p173
      %s176 = sadd.s32 %s175, 1
      %p179 = scmp.eq.s32.totalorder %s19, 1
      %p180 = scmp.ne.s32.totalorder %s175, %s177
      %p181 = scmp.eq.s32.totalorder %s19, 0
      %p182 = por %p180, %p181
      %p183 = scmp.ne.s32.totalorder %s175, %s177
      %p184 = scmp.eq.s32.totalorder %s24, 1
      %p185 = por %p183, %p184
      %p186 = scmp.ne.s32.totalorder %s177, %s178
      %p187 = scmp.eq.s32.totalorder %s24, 0
      %p188 = por %p186, %p187
      %p189 = scmp.ne.s32.totalorder %s177, %s178
      %p190 = scmp.eq.s32.totalorder %s25, 1
      %p191 = por %p189, %p190
      %p193 = scmp.ne.s32.totalorder %s178, %s192
      %p194 = scmp.eq.s32.totalorder %s25, 0
      %p195 = por %p193, %p194
      %s196 = ssub.s32 %s26, %s38
      %p197 = scmp.eq.s32.totalorder %s196, 0
      %s199 = sadd.s32 %s198, 1
      %s200 = scalar_select %p197, %s198, %s199
      %p203 = pneg %p197
      %p204 = scmp.eq.s32.totalorder %s19, 1
      %p205 = por %p203, %p204
      %p206 = scmp.ne.s32.totalorder %s198, %s201
      %p207 = scmp.eq.s32.totalorder %s19, 0
      %p208 = por %p206, %p207
      %p209 = scmp.ne.s32.totalorder %s198, %s201
      %p210 = scmp.eq.s32.totalorder %s24, 1
      %p211 = por %p209, %p210
      %p212 = scmp.ne.s32.totalorder %s201, %s202
      %p213 = scmp.eq.s32.totalorder %s24, 0
      %p214 = por %p212, %p213
      %p215 = scmp.ne.s32.totalorder %s201, %s202
      %p216 = scmp.eq.s32.totalorder %s25, 1
      %p217 = por %p215, %p216
      %p219 = scmp.ne.s32.totalorder %s202, %s218
      %p220 = scmp.eq.s32.totalorder %s25, 0
      %p221 = por %p219, %p220
      %p222 = scmp.le.s32.totalorder 1, %s19
      %p223 = scmp.lt.s32.totalorder %s19, 3
      %p224 = pnand %p222, %p223
      %p225 = pneg %p224
      // Predicated region
      $region9: #{tpu_custom_call.1} parent=5 // pred_check
        _
      $region10: #{tpu_custom_call.1} parent=5 // pred_check_branch
        %227 = sbr.rel (%p224) target = $region12
      $region11: #{tpu_custom_call.1} parent=5 // pred_region
        %s228 = ssub.s32 %s19, 1
        // Predicated region
        $region13: #{tpu_custom_call.1} parent=11 // pred_check
          %p229 = pneg %p57
        $region14: #{tpu_custom_call.1} parent=11 // pred_check_branch
          %231 = sbr.rel (%p229) target = $region16
        $region15: #{tpu_custom_call.1} parent=11 // pred_region
          %s232 = smul.u32 8, %s28
          %s234 = ssub.s32 512, 512
          %235 = vsyncadd [#allocation4], %s234
          %s236 = smul.addr %s232, 64
          %s237 = scalar_lea.hbm %s0, %s236
          %s238 = sshll.u32 [#allocation3], 4
          %s239 = int_to_ptr.vmem [resolvable:$true] %s238
          %244 = dma.hbm_to_vmem [thread:$0]  %s237, 512, %s239, [#allocation4], 64, 64, 4
        $region16: #{tpu_custom_call.1} parent=11 // pred_fallthru
          _
        // Predicated region
        $region17: #{tpu_custom_call.1} parent=11 // pred_check
          %p245 = pneg %p104
        $region18: #{tpu_custom_call.1} parent=11 // pred_check_branch
          %247 = sbr.rel (%p245) target = $region20
        $region19: #{tpu_custom_call.1} parent=11 // pred_region
          _
        $region20: #{tpu_custom_call.1} parent=11 // pred_fallthru
          _
        // Predicated region
        $region21: #{tpu_custom_call.1} parent=11 // pred_check
          %p248 = pneg %p125
        $region22: #{tpu_custom_call.1} parent=11 // pred_check_branch
          %250 = sbr.rel (%p248) target = $region24
        $region23: #{tpu_custom_call.1} parent=11 // pred_region
          %s252 = ssub.s32 4096, 4096
          %253 = vsyncadd [#allocation7], %s252
          %s254 = sshll.u32 [#allocation8], 4
          %s255 = int_to_ptr.vmem [resolvable:$true] %s254
          %260 = dma.hbm_to_vmem [thread:$0]  %s3, 4096, %s255, [#allocation7], 128, 128, 8
        $region24: #{tpu_custom_call.1} parent=11 // pred_fallthru
          _
        // Predicated region
        $region25: #{tpu_custom_call.1} parent=11 // pred_check
          %p261 = pneg %p146
        $region26: #{tpu_custom_call.1} parent=11 // pred_check_branch
          %263 = sbr.rel (%p261) target = $region28
        $region27: #{tpu_custom_call.1} parent=11 // pred_region
          _
        $region28: #{tpu_custom_call.1} parent=11 // pred_fallthru
          _
        // Predicated region
        $region29: #{tpu_custom_call.1} parent=11 // pred_check
          %p264 = pneg %p167
        $region30: #{tpu_custom_call.1} parent=11 // pred_check_branch
          %266 = sbr.rel (%p264) target = $region32
        $region31: #{tpu_custom_call.1} parent=11 // pred_region
          %s268 = ssub.s32 2048, 2048
          %269 = vsyncadd [#allocation10], %s268
          %s270 = sshll.u32 [#allocation9], 4
          %s271 = int_to_ptr.vmem [resolvable:$true] %s270
          %276 = dma.hbm_to_vmem [thread:$0]  %s5, 2048, %s271, [#allocation10], 64, 64, 4
        $region32: #{tpu_custom_call.1} parent=11 // pred_fallthru
          _
        // Predicated region
        $region33: #{tpu_custom_call.1} parent=11 // pred_check
          %p277 = pneg %p188
        $region34: #{tpu_custom_call.1} parent=11 // pred_check_branch
          %279 = sbr.rel (%p277) target = $region36
        $region35: #{tpu_custom_call.1} parent=11 // pred_region
          _
        $region36: #{tpu_custom_call.1} parent=11 // pred_fallthru
          _
      $region12: #{tpu_custom_call.1} parent=5 // pred_fallthru
        _
      %p280 = scmp.lt.s32.totalorder %s19, 2
      // Predicated region
      $region37: #{tpu_custom_call.1} parent=5 // pred_check
        %p281 = pneg %p280
      $region38: #{tpu_custom_call.1} parent=5 // pred_check_branch
        %283 = sbr.rel (%p281) target = $region40
      $region39: #{tpu_custom_call.1} parent=5 // pred_region
        // Predicated region
        $region41: #{tpu_custom_call.1} parent=39 // pred_check
          %p284 = pneg %p77
        $region42: #{tpu_custom_call.1} parent=39 // pred_check_branch
          %286 = sbr.rel (%p284) target = $region44
        $region43: #{tpu_custom_call.1} parent=39 // pred_region
          %s287 = sand.u32 %s19, 1
          %s288 = scalar_lea.sflag [#allocation7], %s287
          %s289 = sand.u32 %s67, 1
          %s290 = smul.addr %s289, 64
          %s291 = scalar_lea.vmem [#allocation6], %s290
          %s293 = ssub.s32 1024, 1024
          %294 = vsyncadd %s288, %s293
          %s295 = smul.addr %s27, 64
          %s296 = scalar_lea.hbm %s1, %s295
          %s297 = sshll.u32 %s291, 4
          %s298 = int_to_ptr.vmem [resolvable:$true] %s297
          %303 = dma.hbm_to_vmem [thread:$0]  %s296, 1024, %s298, %s288, 128, 64, 4
        $region44: #{tpu_custom_call.1} parent=39 // pred_fallthru
          _
      $region40: #{tpu_custom_call.1} parent=5 // pred_fallthru
        _
      %p304 = scmp.le.s32.totalorder 1, %s19
      %p305 = scmp.lt.s32.totalorder %s19, 3
      %p306 = pnand %p304, %p305
      %p307 = pneg %p306
      // Predicated region
      $region45: #{tpu_custom_call.1} parent=5 // pred_check
        _
      $region46: #{tpu_custom_call.1} parent=5 // pred_check_branch
        %309 = sbr.rel (%p306) target = $region48
      $region47: #{tpu_custom_call.1} parent=5 // pred_region
        %s310 = ssub.s32 %s19, 1
        // Predicated region
        $region49: #{tpu_custom_call.1} parent=47 // pred_check
          %p311 = pneg %p57
        $region50: #{tpu_custom_call.1} parent=47 // pred_check_branch
          %313 = sbr.rel (%p311) target = $region52
        $region51: #{tpu_custom_call.1} parent=47 // pred_region
          %314 = dma.done [#allocation4], 512
        $region52: #{tpu_custom_call.1} parent=47 // pred_fallthru
          _
        %s315 = sand.u32 %s24, 1
        %s316 = scalar_lea.sflag [#allocation7], %s315
        %s317 = sand.u32 %s70, 1
        %s318 = smul.addr %s317, 64
        %s319 = scalar_lea.vmem [#allocation6], %s318
        // Predicated region
        $region53: #{tpu_custom_call.1} parent=47 // pred_check
          %p320 = pneg %p83
        $region54: #{tpu_custom_call.1} parent=47 // pred_check_branch
          %322 = sbr.rel (%p320) target = $region56
        $region55: #{tpu_custom_call.1} parent=47 // pred_region
          %323 = dma.done %s316, 1024
        $region56: #{tpu_custom_call.1} parent=47 // pred_fallthru
          _
        // Predicated region
        $region57: #{tpu_custom_call.1} parent=47 // pred_check
          %p324 = pneg %p125
        $region58: #{tpu_custom_call.1} parent=47 // pred_check_branch
          %326 = sbr.rel (%p324) target = $region60
        $region59: #{tpu_custom_call.1} parent=47 // pred_region
          %327 = dma.done [#allocation7], 4096
        $region60: #{tpu_custom_call.1} parent=47 // pred_fallthru
          _
        // Predicated region
        $region61: #{tpu_custom_call.1} parent=47 // pred_check
          %p328 = pneg %p167
        $region62: #{tpu_custom_call.1} parent=47 // pred_check_branch
          %330 = sbr.rel (%p328) target = $region64
        $region63: #{tpu_custom_call.1} parent=47 // pred_region
          %331 = dma.done [#allocation10], 2048
        $region64: #{tpu_custom_call.1} parent=47 // pred_fallthru
          _
        %p332 = pneg %p57
        %p333 = pneg %p54
        %s334 = sand.u32 %s24, 1
        %s335 = scalar_lea.sflag [#allocation7], %s334
        %s336 = sand.u32 %s70, 1
        %s337 = smul.addr %s336, 64
        %s338 = scalar_lea.vmem [#allocation6], %s337
        %p339 = pneg %p83
        %p340 = pneg %p80
        %p341 = pneg %p104
        %p342 = pneg %p101
        %p343 = pneg %p125
        %p344 = pneg %p122
        %p345 = pneg %p146
        %p346 = pneg %p143
        %p347 = pneg %p167
        %p348 = pneg %p164
        %p349 = pneg %p188
        %p350 = pneg %p185
        %p351 = pneg %p214
        %p352 = pneg %p211
        %s353 = smul.u32 8, %s28
        %v355 = vld [vmem:[#allocation3] sm:$0xf]
        %v356 = vld [vmem:[#allocation3 + $0x4] sm:$0xf]
        %v357 = vld [vmem:[#allocation3 + $0x8] sm:$0xf]
        %v358 = vld [vmem:[#allocation3 + $0xc] sm:$0xf]
        %v359 = vld [vmem:[#allocation3 + $0x10] sm:$0xf]
        %v360 = vld [vmem:[#allocation3 + $0x14] sm:$0xf]
        %v361 = vld [vmem:[#allocation3 + $0x18] sm:$0xf]
        %v362 = vld [vmem:[#allocation3 + $0x1c] sm:$0xf]
        %v363 = vld [vmem:[%s319] sm:$0xf]
        %v364 = vld [vmem:[%s319 + $0x4] sm:$0xf]
        %v365 = vld [vmem:[%s319 + $0x8] sm:$0xf]
        %v366 = vld [vmem:[%s319 + $0xc] sm:$0xf]
        %v367 = vld [vmem:[%s319 + $0x10] sm:$0xf]
        %v368 = vld [vmem:[%s319 + $0x14] sm:$0xf]
        %v369 = vld [vmem:[%s319 + $0x18] sm:$0xf]
        %v370 = vld [vmem:[%s319 + $0x1c] sm:$0xf]
        %v371 = vld [vmem:[%s319 + $0x20] sm:$0xf]
        %v372 = vld [vmem:[%s319 + $0x24] sm:$0xf]
        %v373 = vld [vmem:[%s319 + $0x28] sm:$0xf]
        %v374 = vld [vmem:[%s319 + $0x2c] sm:$0xf]
        %v375 = vld [vmem:[%s319 + $0x30] sm:$0xf]
        %v376 = vld [vmem:[%s319 + $0x34] sm:$0xf]
        %v377 = vld [vmem:[%s319 + $0x38] sm:$0xf]
        %v378 = vld [vmem:[%s319 + $0x3c] sm:$0xf]
        %v387 = vunpack.c.l.b16 %v355
        %v388 = vunpack.c.l.b16 %v356
        %v389 = vunpack.c.l.b16 %v357
        %v390 = vunpack.c.l.b16 %v358
        %v391 = vunpack.c.l.b16 %v359
        %v392 = vunpack.c.l.b16 %v360
        %v393 = vunpack.c.l.b16 %v361
        %v394 = vunpack.c.l.b16 %v362
        %v395 = vpack.c.b16 %v388, %v387
        %v396 = vpack.c.b16 %v390, %v389
        %v397 = vpack.c.b16 %v392, %v391
        %v398 = vpack.c.b16 %v394, %v393
        %v419 = vunpack.c.l.b16 %v363
        %v420 = vunpack.c.l.b16 %v364
        %v421 = vunpack.c.l.b16 %v365
        %v422 = vunpack.c.l.b16 %v366
        %v423 = vunpack.c.l.b16 %v367
        %v424 = vunpack.c.l.b16 %v368
        %v425 = vunpack.c.l.b16 %v369
        %v426 = vunpack.c.l.b16 %v370
        %v427 = vunpack.c.l.b16 %v371
        %v428 = vunpack.c.l.b16 %v372
        %v429 = vunpack.c.l.b16 %v373
        %v430 = vunpack.c.l.b16 %v374
        %v431 = vunpack.c.l.b16 %v375
        %v432 = vunpack.c.l.b16 %v376
        %v433 = vunpack.c.l.b16 %v377
        %v434 = vunpack.c.l.b16 %v378
        %v435 = vpack.c.b16 %v420, %v419
        %v436 = vpack.c.b16 %v422, %v421
        %v437 = vpack.c.b16 %v424, %v423
        %v438 = vpack.c.b16 %v426, %v425
        %v439 = vpack.c.b16 %v428, %v427
        %v440 = vpack.c.b16 %v430, %v429
        %v441 = vpack.c.b16 %v432, %v431
        %v442 = vpack.c.b16 %v434, %v433
        %451 = vmatprep.subr.bf16.mxu0 0
        %452 = vmatpush1.bf16.msra.mxu0 %v435
        %453 = vmatprep.subr.bf16.mxu0 0
        %454 = vmatpush1.bf16.msra.mxu0 %v436
        %455 = vmatprep.subr.bf16.mxu0 0
        %456 = vmatpush1.bf16.msra.mxu0 %v437
        %457 = vmatprep.subr.bf16.mxu0 0
        %458 = vmatpush1.bf16.msra.mxu0 %v438
        %459 = vmatprep.subr.bf16.mxu0 0
        %460 = vmatpush1.bf16.msra.mxu0 %v439
        %461 = vmatprep.subr.bf16.mxu0 0
        %462 = vmatpush1.bf16.msra.mxu0 %v440
        %463 = vmatprep.subr.bf16.mxu0 0
        %464 = vmatpush1.bf16.msra.mxu0 %v441
        %465 = vmatprep.subr.bf16.mxu0 0
        %466 = vmatpush1.bf16.msra.mxu0 %v442
        %467 = vmatprep.subr.bf16.mxu0 0
        %468 = vmatpush1.bf16.msra.mxu0 0
        %469 = vmatprep.subr.bf16.mxu0 0
        %470 = vmatpush1.bf16.msra.mxu0 0
        %471 = vmatprep.subr.bf16.mxu0 0
        %472 = vmatpush1.bf16.msra.mxu0 0
        %473 = vmatprep.subr.bf16.mxu0 0
        %474 = vmatpush1.bf16.msra.mxu0 0
        %475 = vmatprep.subr.bf16.mxu0 0
        %476 = vmatpush1.bf16.msra.mxu0 0
        %477 = vmatprep.subr.bf16.mxu0 0
        %478 = vmatpush1.bf16.msra.mxu0 0
        %479 = vmatprep.subr.bf16.mxu0 0
        %480 = vmatpush1.bf16.msra.mxu0 0
        %481 = vmatprep.subr.bf16.mxu0 0
        %482 = vmatpush1.bf16.msra.mxu0 0
        %483 = vmatprep.mubr.bf16.mxu0 0
        %484 = vmatmul.mubr.bf16.gmra.mrb[0].mxu0 %v395
        %v485 = vpop.f32.mrb[0].mxu0
        %v486 = vadd.f32 0.0, %v485
        %v487 = vpop.f32.mrb[0].mxu0
        %v488 = vpop.f32.mrb[0].mxu0
        %v489 = vadd.f32 0.0, %v488
        %v490 = vpop.f32.mrb[0].mxu0
        %491 = vmatprep.mubr.bf16.mxu0 0
        %492 = vmatmul.mubr.bf16.gmra.mrb[0].mxu0 %v396
        %v493 = vpop.f32.mrb[0].mxu0
        %v494 = vadd.f32 0.0, %v493
        %v495 = vpop.f32.mrb[0].mxu0
        %v496 = vpop.f32.mrb[0].mxu0
        %v497 = vadd.f32 0.0, %v496
        %v498 = vpop.f32.mrb[0].mxu0
        %499 = vmatprep.mubr.bf16.mxu0 0
        %500 = vmatmul.mubr.bf16.gmra.mrb[0].mxu0 %v397
        %v501 = vpop.f32.mrb[0].mxu0
        %v502 = vadd.f32 0.0, %v501
        %v503 = vpop.f32.mrb[0].mxu0
        %v504 = vpop.f32.mrb[0].mxu0
        %v505 = vadd.f32 0.0, %v504
        %v506 = vpop.f32.mrb[0].mxu0
        %507 = vmatprep.mubr.bf16.mxu0 0
        %508 = vmatmul.mubr.bf16.gmra.mrb[0].mxu0 %v398
        %v509 = vpop.f32.mrb[0].mxu0
        %v510 = vadd.f32 0.0, %v509
        %v511 = vpop.f32.mrb[0].mxu0
        %v512 = vpop.f32.mrb[0].mxu0
        %v513 = vadd.f32 0.0, %v512
        %v514 = vpop.f32.mrb[0].mxu0
        %515 = vdwg.mxu0
        %p516 = scmp.eq.s32.totalorder %s29, 1
        %s517 = scalar_select %p516, 6, 7
        %v518 = vlaneseq
        %v519 = vshrl.u32 %v518, 7
        %v520 = vstv %s517
        %vm521 = vcmp.lt.s32.totalorder %v519, %v520
        %v522 = vsel %vm521, 1, 0
        %vm523 = vcmp.eq.s32.totalorder %v522, 1
        %v524 = vsel %vm523, %v486, -1e+30
        %v525 = vsel %vm523, %v489, -1e+30
        %v526 = vsel %vm523, %v494, -1e+30
        %v527 = vsel %vm523, %v497, -1e+30
        %v528 = vsel %vm523, %v502, -1e+30
        %v529 = vsel %vm523, %v505, -1e+30
        %v530 = vsel %vm523, %v510, -1e+30
        %v531 = vsel %vm523, %v513, -1e+30
        %v532 = vrot.slane %v524, 4
        %v533 = vmax.f32 %v524, %v532
        %v534 = vrot.slane %v533, 2
        %v535 = vmax.f32 %v533, %v534
        %v536 = vrot.slane %v535, 1
        %v537 = vmax.f32 %v535, %v536
        %v538 = vrot.slane %v525, 4
        %v539 = vmax.f32 %v525, %v538
        %v540 = vrot.slane %v539, 2
        %v541 = vmax.f32 %v539, %v540
        %v542 = vrot.slane %v541, 1
        %v543 = vmax.f32 %v541, %v542
        %v544 = vrot.slane %v526, 4
        %v545 = vmax.f32 %v526, %v544
        %v546 = vrot.slane %v545, 2
        %v547 = vmax.f32 %v545, %v546
        %v548 = vrot.slane %v547, 1
        %v549 = vmax.f32 %v547, %v548
        %v550 = vrot.slane %v527, 4
        %v551 = vmax.f32 %v527, %v550
        %v552 = vrot.slane %v551, 2
        %v553 = vmax.f32 %v551, %v552
        %v554 = vrot.slane %v553, 1
        %v555 = vmax.f32 %v553, %v554
        %v556 = vrot.slane %v528, 4
        %v557 = vmax.f32 %v528, %v556
        %v558 = vrot.slane %v557, 2
        %v559 = vmax.f32 %v557, %v558
        %v560 = vrot.slane %v559, 1
        %v561 = vmax.f32 %v559, %v560
        %v562 = vrot.slane %v529, 4
        %v563 = vmax.f32 %v529, %v562
        %v564 = vrot.slane %v563, 2
        %v565 = vmax.f32 %v563, %v564
        %v566 = vrot.slane %v565, 1
        %v567 = vmax.f32 %v565, %v566
        %v568 = vrot.slane %v530, 4
        %v569 = vmax.f32 %v530, %v568
        %v570 = vrot.slane %v569, 2
        %v571 = vmax.f32 %v569, %v570
        %v572 = vrot.slane %v571, 1
        %v573 = vmax.f32 %v571, %v572
        %v574 = vrot.slane %v531, 4
        %v575 = vmax.f32 %v531, %v574
        %v576 = vrot.slane %v575, 2
        %v577 = vmax.f32 %v575, %v576
        %v578 = vrot.slane %v577, 1
        %v579 = vmax.f32 %v577, %v578
        %vm588 = vcmask 1041409
        %v589 = vsel %vm588, %v543, %v537
        %vm590 = vcmask 1042434
        %v591 = vsel %vm590, %v549, %v589
        %vm592 = vcmask 1043459
        %v593 = vsel %vm592, %v555, %v591
        %vm594 = vcmask 1044484
        %v595 = vsel %vm594, %v561, %v593
        %vm596 = vcmask 1045509
        %v597 = vsel %vm596, %v567, %v595
        %vm598 = vcmask 1046534
        %v599 = vsel %vm598, %v573, %v597
        %vm600 = vcmask 1047559
        %v601 = vsel %vm600, %v579, %v599
        %s603 = smul.u32 %s29, 8
        %s604 = scalar_lea.vmem [#allocation2], %s603
        %605 = vst [vmem:[%s604] sm:$0xff] %v601
        // Predicated region
        $region65: #{tpu_custom_call.1} parent=47 // pred_check
          %p606 = pneg %p516
        $region66: #{tpu_custom_call.1} parent=47 // pred_check_branch
          %608 = sbr.rel (%p606) target = $region68
        $region67: #{tpu_custom_call.1} parent=47 // pred_region
          %v609 = vld [vmem:[#allocation2] sm:$0xff]
          %s610 = scalar_lea.vmem [#allocation2], 8
          %v611 = vld [vmem:[%s610] sm:$0xff]
          %v612 = vld [vmem:[%s2] sm:$0x3]
          %v614 = vlaneseq
          %v615 = vshrl.u32 %v614, 7
          %v616 = vsub.s32 0, %v615
          %v617 = vrot.slane %v612, %v616
          %v618 = vlaneseq
          %v619 = vshrl.u32 %v618, 7
          %v620 = vsub.s32 1, %v619
          %v621 = vrot.slane %v612, %v620
          %v624 = vadd.f32 %v609, %v617
          %v625 = vadd.f32 %v611, %v621
          %v626 = vmax.f32 %v624, 0.0
          %v627 = vmax.f32 %v625, 0.0
          %v628 = vpack.c.bf16 %v626, %v626
          %v629 = vpack.c.bf16 %v627, %v627
          %v630 = vld [vmem:[#allocation8] sm:$0xff]
          %v631 = vld [vmem:[#allocation8 + $0x8] sm:$0xff]
          %v632 = vld [vmem:[#allocation8 + $0x10] sm:$0xff]
          %v633 = vld [vmem:[#allocation8 + $0x18] sm:$0xff]
          %v634 = vld [vmem:[#allocation8 + $0x20] sm:$0xff]
          %v635 = vld [vmem:[#allocation8 + $0x28] sm:$0xff]
          %v636 = vld [vmem:[#allocation8 + $0x30] sm:$0xff]
          %v637 = vld [vmem:[#allocation8 + $0x38] sm:$0xff]
          %v638 = vld [vmem:[#allocation8 + $0x40] sm:$0xff]
          %v639 = vld [vmem:[#allocation8 + $0x48] sm:$0xff]
          %v640 = vld [vmem:[#allocation8 + $0x50] sm:$0xff]
          %v641 = vld [vmem:[#allocation8 + $0x58] sm:$0xff]
          %v642 = vld [vmem:[#allocation8 + $0x60] sm:$0xff]
          %v643 = vld [vmem:[#allocation8 + $0x68] sm:$0xff]
          %v644 = vld [vmem:[#allocation8 + $0x70] sm:$0xff]
          %v645 = vld [vmem:[#allocation8 + $0x78] sm:$0xff]
          %v646 = vld [vmem:[#allocation8 + $0x80] sm:$0xff]
          %v647 = vld [vmem:[#allocation8 + $0x88] sm:$0xff]
          %v648 = vld [vmem:[#allocation8 + $0x90] sm:$0xff]
          %v649 = vld [vmem:[#allocation8 + $0x98] sm:$0xff]
          %v650 = vld [vmem:[#allocation8 + $0xa0] sm:$0xff]
          %v651 = vld [vmem:[#allocation8 + $0xa8] sm:$0xff]
          %v652 = vld [vmem:[#allocation8 + $0xb0] sm:$0xff]
          %v653 = vld [vmem:[#allocation8 + $0xb8] sm:$0xff]
          %v654 = vld [vmem:[#allocation8 + $0xc0] sm:$0xff]
          %v655 = vld [vmem:[#allocation8 + $0xc8] sm:$0xff]
          %v656 = vld [vmem:[#allocation8 + $0xd0] sm:$0xff]
          %v657 = vld [vmem:[#allocation8 + $0xd8] sm:$0xff]
          %v658 = vld [vmem:[#allocation8 + $0xe0] sm:$0xff]
          %v659 = vld [vmem:[#allocation8 + $0xe8] sm:$0xff]
          %v660 = vld [vmem:[#allocation8 + $0xf0] sm:$0xff]
          %v661 = vld [vmem:[#allocation8 + $0xf8] sm:$0xff]
          %v662 = vld [vmem:[%s4] sm:$0x3]
          %v664 = vlaneseq
          %v665 = vshrl.u32 %v664, 7
          %v666 = vsub.s32 0, %v665
          %v667 = vrot.slane %v662, %v666
          %v668 = vlaneseq
          %v669 = vshrl.u32 %v668, 7
          %v670 = vsub.s32 1, %v669
          %v671 = vrot.slane %v662, %v670
          %v706 = vunpack.c.l.b16 %v630
          %v707 = vunpack.c.h.b16 %v630
          %v708 = vunpack.c.l.b16 %v631
          %v709 = vunpack.c.h.b16 %v631
          %v710 = vunpack.c.l.b16 %v632
          %v711 = vunpack.c.h.b16 %v632
          %v712 = vunpack.c.l.b16 %v633
          %v713 = vunpack.c.h.b16 %v633
          %v714 = vunpack.c.l.b16 %v634
          %v715 = vunpack.c.h.b16 %v634
          %v716 = vunpack.c.l.b16 %v635
          %v717 = vunpack.c.h.b16 %v635
          %v718 = vunpack.c.l.b16 %v636
          %v719 = vunpack.c.h.b16 %v636
          %v720 = vunpack.c.l.b16 %v637
          %v721 = vunpack.c.h.b16 %v637
          %v722 = vunpack.c.l.b16 %v638
          %v723 = vunpack.c.h.b16 %v638
          %v724 = vunpack.c.l.b16 %v639
          %v725 = vunpack.c.h.b16 %v639
          %v726 = vunpack.c.l.b16 %v640
          %v727 = vunpack.c.h.b16 %v640
          %v728 = vunpack.c.l.b16 %v641
          %v729 = vunpack.c.h.b16 %v641
          %v730 = vunpack.c.l.b16 %v642
          %v731 = vunpack.c.h.b16 %v642
          %v732 = vunpack.c.l.b16 %v643
          %v733 = vunpack.c.h.b16 %v643
          %v734 = vunpack.c.l.b16 %v644
          %v735 = vunpack.c.h.b16 %v644
          %v736 = vunpack.c.l.b16 %v645
          %v737 = vunpack.c.h.b16 %v645
          %v738 = vunpack.c.l.b16 %v646
          %v739 = vunpack.c.h.b16 %v646
          %v740 = vunpack.c.l.b16 %v647
          %v741 = vunpack.c.h.b16 %v647
          %v742 = vunpack.c.l.b16 %v648
          %v743 = vunpack.c.h.b16 %v648
          %v744 = vunpack.c.l.b16 %v649
          %v745 = vunpack.c.h.b16 %v649
          %v746 = vunpack.c.l.b16 %v650
          %v747 = vunpack.c.h.b16 %v650
          %v748 = vunpack.c.l.b16 %v651
          %v749 = vunpack.c.h.b16 %v651
          %v750 = vunpack.c.l.b16 %v652
          %v751 = vunpack.c.h.b16 %v652
          %v752 = vunpack.c.l.b16 %v653
          %v753 = vunpack.c.h.b16 %v653
          %v754 = vunpack.c.l.b16 %v654
          %v755 = vunpack.c.h.b16 %v654
          %v756 = vunpack.c.l.b16 %v655
          %v757 = vunpack.c.h.b16 %v655
          %v758 = vunpack.c.l.b16 %v656
          %v759 = vunpack.c.h.b16 %v656
          %v760 = vunpack.c.l.b16 %v657
          %v761 = vunpack.c.h.b16 %v657
          %v762 = vunpack.c.l.b16 %v658
          %v763 = vunpack.c.h.b16 %v658
          %v764 = vunpack.c.l.b16 %v659
          %v765 = vunpack.c.h.b16 %v659
          %v766 = vunpack.c.l.b16 %v660
          %v767 = vunpack.c.h.b16 %v660
          %v768 = vunpack.c.l.b16 %v661
          %v769 = vunpack.c.h.b16 %v661
          %v770 = vpack.c.b16 %v708, %v706
          %v771 = vpack.c.b16 %v709, %v707
          %v772 = vpack.c.b16 %v712, %v710
          %v773 = vpack.c.b16 %v713, %v711
          %v774 = vpack.c.b16 %v716, %v714
          %v775 = vpack.c.b16 %v717, %v715
          %v776 = vpack.c.b16 %v720, %v718
          %v777 = vpack.c.b16 %v721, %v719
          %v778 = vpack.c.b16 %v724, %v722
          %v779 = vpack.c.b16 %v725, %v723
          %v780 = vpack.c.b16 %v728, %v726
          %v781 = vpack.c.b16 %v729, %v727
          %v782 = vpack.c.b16 %v732, %v730
          %v783 = vpack.c.b16 %v733, %v731
          %v784 = vpack.c.b16 %v736, %v734
          %v785 = vpack.c.b16 %v737, %v735
          %v786 = vpack.c.b16 %v740, %v738
          %v787 = vpack.c.b16 %v741, %v739
          %v788 = vpack.c.b16 %v744, %v742
          %v789 = vpack.c.b16 %v745, %v743
          %v790 = vpack.c.b16 %v748, %v746
          %v791 = vpack.c.b16 %v749, %v747
          %v792 = vpack.c.b16 %v752, %v750
          %v793 = vpack.c.b16 %v753, %v751
          %v794 = vpack.c.b16 %v756, %v754
          %v795 = vpack.c.b16 %v757, %v755
          %v796 = vpack.c.b16 %v760, %v758
          %v797 = vpack.c.b16 %v761, %v759
          %v798 = vpack.c.b16 %v764, %v762
          %v799 = vpack.c.b16 %v765, %v763
          %v800 = vpack.c.b16 %v768, %v766
          %v801 = vpack.c.b16 %v769, %v767
          %834 = vmatprep.subr.bf16.mxu0 %v771
          %835 = vmatpush1.bf16.msra.mxu0 %v770
          %836 = vmatprep.subr.bf16.mxu0 %v773
          %837 = vmatpush1.bf16.msra.mxu0 %v772
          %838 = vmatprep.subr.bf16.mxu0 %v775
          %839 = vmatpush1.bf16.msra.mxu0 %v774
          %840 = vmatprep.subr.bf16.mxu0 %v777
          %841 = vmatpush1.bf16.msra.mxu0 %v776
          %842 = vmatprep.subr.bf16.mxu0 %v779
          %843 = vmatpush1.bf16.msra.mxu0 %v778
          %844 = vmatprep.subr.bf16.mxu0 %v781
          %845 = vmatpush1.bf16.msra.mxu0 %v780
          %846 = vmatprep.subr.bf16.mxu0 %v783
          %847 = vmatpush1.bf16.msra.mxu0 %v782
          %848 = vmatprep.subr.bf16.mxu0 %v785
          %849 = vmatpush1.bf16.msra.mxu0 %v784
          %850 = vmatprep.subr.bf16.mxu0 %v787
          %851 = vmatpush1.bf16.msra.mxu0 %v786
          %852 = vmatprep.subr.bf16.mxu0 %v789
          %853 = vmatpush1.bf16.msra.mxu0 %v788
          %854 = vmatprep.subr.bf16.mxu0 %v791
          %855 = vmatpush1.bf16.msra.mxu0 %v790
          %856 = vmatprep.subr.bf16.mxu0 %v793
          %857 = vmatpush1.bf16.msra.mxu0 %v792
          %858 = vmatprep.subr.bf16.mxu0 %v795
          %859 = vmatpush1.bf16.msra.mxu0 %v794
          %860 = vmatprep.subr.bf16.mxu0 %v797
          %861 = vmatpush1.bf16.msra.mxu0 %v796
          %862 = vmatprep.subr.bf16.mxu0 %v799
          %863 = vmatpush1.bf16.msra.mxu0 %v798
          %864 = vmatprep.subr.bf16.mxu0 %v801
          %865 = vmatpush1.bf16.msra.mxu0 %v800
          %866 = vmatprep.mubr.bf16.mxu0 %v629
          %867 = vmatmul.mubr.bf16.gmra.mrb[0].mxu0 %v628
          %v868 = vpop.f32.mrb[0].mxu0
          %v869 = vadd.f32 %v667, %v868
          %v870 = vpop.f32.mrb[0].mxu0
          %v871 = vadd.f32 %v671, %v870
          %v872 = vpop.f32.mrb[0].mxu0
          %v873 = vpop.f32.mrb[0].mxu0
          %874 = vdwg.mxu0
          %v875 = vsub.f32 0.0, %v869
          %v876 = vsub.f32 0.0, %v871
          %v877 = vmul.f32 %v875, 1.442695
          %v878 = vpow.pop %v877
          %v879 = vmul.f32 %v876, 1.442695
          %v880 = vpow.pop %v879
          %v881 = vadd.f32 %v878, 1.0
          %v882 = vadd.f32 %v880, 1.0
          %v883 = vrcp.pop %v881
          %v884 = vrcp.pop %v882
          %v885 = vmax.f32 %v869, 0.0
          %v886 = vmax.f32 %v871, 0.0
          %v887 = vmul.f32 %v883, %v885
          %v888 = vmul.f32 %v884, %v886
          %v889 = vsub.f32 1.0, %v883
          %v890 = vsub.f32 1.0, %v884
          %v891 = vmul.f32 %v889, %v626
          %v892 = vmul.f32 %v890, %v627
          %v893 = vadd.f32 %v887, %v891
          %v894 = vadd.f32 %v888, %v892
          %v895 = vpack.c.bf16 %v893, %v893
          %v896 = vpack.c.bf16 %v894, %v894
          %v897 = vld [vmem:[#allocation9] sm:$0xf]
          %v898 = vld [vmem:[#allocation9 + $0x4] sm:$0xf]
          %v899 = vld [vmem:[#allocation9 + $0x8] sm:$0xf]
          %v900 = vld [vmem:[#allocation9 + $0xc] sm:$0xf]
          %v901 = vld [vmem:[#allocation9 + $0x10] sm:$0xf]
          %v902 = vld [vmem:[#allocation9 + $0x14] sm:$0xf]
          %v903 = vld [vmem:[#allocation9 + $0x18] sm:$0xf]
          %v904 = vld [vmem:[#allocation9 + $0x1c] sm:$0xf]
          %v905 = vld [vmem:[#allocation9 + $0x20] sm:$0xf]
          %v906 = vld [vmem:[#allocation9 + $0x24] sm:$0xf]
          %v907 = vld [vmem:[#allocation9 + $0x28] sm:$0xf]
          %v908 = vld [vmem:[#allocation9 + $0x2c] sm:$0xf]
          %v909 = vld [vmem:[#allocation9 + $0x30] sm:$0xf]
          %v910 = vld [vmem:[#allocation9 + $0x34] sm:$0xf]
          %v911 = vld [vmem:[#allocation9 + $0x38] sm:$0xf]
          %v912 = vld [vmem:[#allocation9 + $0x3c] sm:$0xf]
          %v913 = vld [vmem:[#allocation9 + $0x40] sm:$0xf]
          %v914 = vld [vmem:[#allocation9 + $0x44] sm:$0xf]
          %v915 = vld [vmem:[#allocation9 + $0x48] sm:$0xf]
          %v916 = vld [vmem:[#allocation9 + $0x4c] sm:$0xf]
          %v917 = vld [vmem:[#allocation9 + $0x50] sm:$0xf]
          %v918 = vld [vmem:[#allocation9 + $0x54] sm:$0xf]
          %v919 = vld [vmem:[#allocation9 + $0x58] sm:$0xf]
          %v920 = vld [vmem:[#allocation9 + $0x5c] sm:$0xf]
          %v921 = vld [vmem:[#allocation9 + $0x60] sm:$0xf]
          %v922 = vld [vmem:[#allocation9 + $0x64] sm:$0xf]
          %v923 = vld [vmem:[#allocation9 + $0x68] sm:$0xf]
          %v924 = vld [vmem:[#allocation9 + $0x6c] sm:$0xf]
          %v925 = vld [vmem:[#allocation9 + $0x70] sm:$0xf]
          %v926 = vld [vmem:[#allocation9 + $0x74] sm:$0xf]
          %v927 = vld [vmem:[#allocation9 + $0x78] sm:$0xf]
          %v928 = vld [vmem:[#allocation9 + $0x7c] sm:$0xf]
          %v929 = vld [vmem:[%s6] sm:$0x1]
          %v931 = vlaneseq
          %v932 = vshrl.u32 %v931, 7
          %v933 = vsub.s32 0, %v932
          %v934 = vrot.slane %v929, %v933
          %v968 = vunpack.c.l.b16 %v897
          %v969 = vunpack.c.l.b16 %v898
          %v970 = vunpack.c.l.b16 %v899
          %v971 = vunpack.c.l.b16 %v900
          %v972 = vunpack.c.l.b16 %v901
          %v973 = vunpack.c.l.b16 %v902
          %v974 = vunpack.c.l.b16 %v903
          %v975 = vunpack.c.l.b16 %v904
          %v976 = vunpack.c.l.b16 %v905
          %v977 = vunpack.c.l.b16 %v906
          %v978 = vunpack.c.l.b16 %v907
          %v979 = vunpack.c.l.b16 %v908
          %v980 = vunpack.c.l.b16 %v909
          %v981 = vunpack.c.l.b16 %v910
          %v982 = vunpack.c.l.b16 %v911
          %v983 = vunpack.c.l.b16 %v912
          %v984 = vunpack.c.l.b16 %v913
          %v985 = vunpack.c.l.b16 %v914
          %v986 = vunpack.c.l.b16 %v915
          %v987 = vunpack.c.l.b16 %v916
          %v988 = vunpack.c.l.b16 %v917
          %v989 = vunpack.c.l.b16 %v918
          %v990 = vunpack.c.l.b16 %v919
          %v991 = vunpack.c.l.b16 %v920
          %v992 = vunpack.c.l.b16 %v921
          %v993 = vunpack.c.l.b16 %v922
          %v994 = vunpack.c.l.b16 %v923
          %v995 = vunpack.c.l.b16 %v924
          %v996 = vunpack.c.l.b16 %v925
          %v997 = vunpack.c.l.b16 %v926
          %v998 = vunpack.c.l.b16 %v927
          %v999 = vunpack.c.l.b16 %v928
          %v1000 = vpack.c.b16 %v969, %v968
          %v1001 = vpack.c.b16 %v971, %v970
          %v1002 = vpack.c.b16 %v973, %v972
          %v1003 = vpack.c.b16 %v975, %v974
          %v1004 = vpack.c.b16 %v977, %v976
          %v1005 = vpack.c.b16 %v979, %v978
          %v1006 = vpack.c.b16 %v981, %v980
          %v1007 = vpack.c.b16 %v983, %v982
          %v1008 = vpack.c.b16 %v985, %v984
          %v1009 = vpack.c.b16 %v987, %v986
          %v1010 = vpack.c.b16 %v989, %v988
          %v1011 = vpack.c.b16 %v991, %v990
          %v1012 = vpack.c.b16 %v993, %v992
          %v1013 = vpack.c.b16 %v995, %v994
          %v1014 = vpack.c.b16 %v997, %v996
          %v1015 = vpack.c.b16 %v999, %v998
          %1032 = vmatprep.subr.bf16.mxu0 0
          %1033 = vmatpush1.bf16.msra.mxu0 %v1000
          %1034 = vmatprep.subr.bf16.mxu0 0
          %1035 = vmatpush1.bf16.msra.mxu0 %v1001
          %1036 = vmatprep.subr.bf16.mxu0 0
          %1037 = vmatpush1.bf16.msra.mxu0 %v1002
          %1038 = vmatprep.subr.bf16.mxu0 0
          %1039 = vmatpush1.bf16.msra.mxu0 %v1003
          %1040 = vmatprep.subr.bf16.mxu0 0
          %1041 = vmatpush1.bf16.msra.mxu0 %v1004
          %1042 = vmatprep.subr.bf16.mxu0 0
          %1043 = vmatpush1.bf16.msra.mxu0 %v1005
          %1044 = vmatprep.subr.bf16.mxu0 0
          %1045 = vmatpush1.bf16.msra.mxu0 %v1006
          %1046 = vmatprep.subr.bf16.mxu0 0
          %1047 = vmatpush1.bf16.msra.mxu0 %v1007
          %1048 = vmatprep.subr.bf16.mxu0 0
          %1049 = vmatpush1.bf16.msra.mxu0 %v1008
          %1050 = vmatprep.subr.bf16.mxu0 0
          %1051 = vmatpush1.bf16.msra.mxu0 %v1009
          %1052 = vmatprep.subr.bf16.mxu0 0
          %1053 = vmatpush1.bf16.msra.mxu0 %v1010
          %1054 = vmatprep.subr.bf16.mxu0 0
          %1055 = vmatpush1.bf16.msra.mxu0 %v1011
          %1056 = vmatprep.subr.bf16.mxu0 0
          %1057 = vmatpush1.bf16.msra.mxu0 %v1012
          %1058 = vmatprep.subr.bf16.mxu0 0
          %1059 = vmatpush1.bf16.msra.mxu0 %v1013
          %1060 = vmatprep.subr.bf16.mxu0 0
          %1061 = vmatpush1.bf16.msra.mxu0 %v1014
          %1062 = vmatprep.subr.bf16.mxu0 0
          %1063 = vmatpush1.bf16.msra.mxu0 %v1015
          %1064 = vmatprep.mubr.bf16.mxu0 %v896
          %1065 = vmatmul.mubr.bf16.gmra.mrb[0].mxu0 %v895
          %v1066 = vpop.f32.mrb[0].mxu0
          %v1067 = vadd.f32 %v934, %v1066
          %v1068 = vpop.f32.mrb[0].mxu0
          %v1069 = vpop.f32.mrb[0].mxu0
          %v1070 = vpop.f32.mrb[0].mxu0
          %1071 = vdwg.mxu0
          %1072 = vst [vmem:[#allocation11] sm:$0xff] %v1067
        $region68: #{tpu_custom_call.1} parent=47 // pred_fallthru
          _
        // Predicated region
        $region69: #{tpu_custom_call.1} parent=47 // pred_check
          %p1073 = pneg %p211
        $region70: #{tpu_custom_call.1} parent=47 // pred_check_branch
          %1075 = sbr.rel (%p1073) target = $region72
        $region71: #{tpu_custom_call.1} parent=47 // pred_region
          %s1077 = ssub.s32 128, 128
          %1078 = vsyncadd [#allocation5], %s1077
          %s1079 = smul.addr %s28, 128
          %s1080 = scalar_lea.hbm %s7, %s1079
          %s1082 = sshll.u32 [#allocation11], 4
          %s1083 = int_to_ptr.vmem [resolvable:$true] %s1082
          %1085 = dma.vmem_to_hbm [thread:$0]  %s1083, 128, %s1080, [#allocation5]
        $region72: #{tpu_custom_call.1} parent=47 // pred_fallthru
          _
        // Predicated region
        $region73: #{tpu_custom_call.1} parent=47 // pred_check
          %p1086 = pneg %p211
        $region74: #{tpu_custom_call.1} parent=47 // pred_check_branch
          %1088 = sbr.rel (%p1086) target = $region76
        $region75: #{tpu_custom_call.1} parent=47 // pred_region
          %1089 = dma.done [#allocation5], 128
        $region76: #{tpu_custom_call.1} parent=47 // pred_fallthru
          _
      $region48: #{tpu_custom_call.1} parent=5 // pred_fallthru
        _
      %p1090 = scmp.le.s32.totalorder 2, %s19
      // Predicated region
      $region77: #{tpu_custom_call.1} parent=5 // pred_check
        %p1091 = pneg %p1090
      $region78: #{tpu_custom_call.1} parent=5 // pred_check_branch
        %1093 = sbr.rel (%p1091) target = $region80
      $region79: #{tpu_custom_call.1} parent=5 // pred_region
        %s1094 = ssub.s32 %s19, 2
      $region80: #{tpu_custom_call.1} parent=5 // pred_fallthru
        _
    $region6: #{tpu_custom_call.1} parent=1 // loop_footer
      %s23 = sadd.s32 1, %s19
    $region7: #{tpu_custom_call.1} parent=1 // loop_footer_branch
      %18 = sbr.rel target = $region3
    $region8: #{tpu_custom_call.1} parent=1 // loop_exit
      _
    %1095 = vsyncpa [#allocation4], 1
    %s1096 = scalar_lea.sflag [#allocation4], 1
    %1097 = vsyncpa %s1096, 1
    %1098 = vsyncpa [#allocation7], 1
    %s1099 = scalar_lea.sflag [#allocation7], 1
    %1100 = vsyncpa %s1099, 1
    %1101 = vsyncpa [#allocation10], 1
    %1102 = vsyncpa [#allocation5], 1
    %s1103 = scalar_lea.sflag [#allocation5], 1
    %1104 = vsyncpa %s1103, 1

</llo_original>
